<compile_context>
chip_gen: v7x
topology: tpu7x:2x2x1
jax: 0.10.0
libtpu: 0.0.40
codegen_flags: <defaults>
</compile_context>

<pallas_src>
import math

import jax
import jax.numpy as jnp
from jax.experimental import pallas as pl
from jax.experimental.pallas import tpu as pltpu

# ---------------- model hyper-parameters (args / dataset) -------------------
N_NODES = 16          # nodes per graph
NUM_FEATURES = 16     # dataset.num_features
HIDDEN = 32           # args.hidden
NUM_CLASSES = 8       # dataset.num_classes
K_HOPS = 4            # args.K
ALPHA = 0.1           # args.alpha
BATCH = 16            # feature sets evaluated per call (demo)
GRID_STEPS = 1        # 1 = single step (recommended); try 2 on v7x (one chunk/TC)
# args.dropout / args.dprate only matter in training mode (identity here).

_HI = jax.lax.Precision.HIGHEST


# ------------------------------ Pallas kernel -------------------------------
def ssgc_kernel(xT_ref, w1T_ref, b1_ref, w2T_ref, b2_ref, mT_ref, out_ref):
    """Transposed (feature-major) layout: rows of the graph sit on the lane axis.

    xT_ref : (F, R)   bf16, R = graphs_per_step * n_nodes (multiple of 128)
    w1T_ref: (H, F)   bf16      b1_ref: (H, 1) f32
    w2T_ref: (C, H)   bf16      b2_ref: (C, 1) f32
    mT_ref : (R, R)   f32  block-diag transpose of the folded propagation matrix
    out_ref: (C, R)   f32  log-probs, lane-dense stores
    """
    # hT = relu(W1^T @ xT + b1)                          (H, R) f32
    h = jnp.dot(w1T_ref[...], xT_ref[...], preferred_element_type=jnp.float32)
    h = jnp.maximum(h + b1_ref[...], 0.0)

    # zT = W2^T @ hT + b2                                (C, R) f32
    z = jnp.dot(w2T_ref[...], h.astype(jnp.bfloat16),
                preferred_element_type=jnp.float32)
    z = z + b2_ref[...]

    # SSGCProp + alpha mix folded into one matmul: y = M @ z  ->  yT = zT @ M^T
    y = jnp.dot(z, mT_ref[...], preferred_element_type=jnp.float32)   # (C, R)

    # log_softmax over classes (sublane axis 0)
    mx = jnp.max(y, axis=0, keepdims=True)
    s = y - mx
    lse = jnp.log(jnp.sum(jnp.exp(s), axis=0, keepdims=True))
    out_ref[...] = s - lse


# --------------------------- host-side algebra ------------------------------
def fold_propagation(p_dense, k_hops, alpha):
    """M = alpha*I + ((1-alpha)/K) * (I+P)^K  — exact fold of SSGCProp."""
    n = p_dense.shape[0]
    eye = jnp.eye(n, dtype=p_dense.dtype)
    ip = eye + p_dense
    ipk = eye
    for _ in range(k_hops):
        ipk = jnp.dot(ipk, ip, precision=_HI)
    return alpha * eye + ((1.0 - alpha) / k_hops) * ipk


def ssgc_forward(x, w1, b1, w2, b2, p_dense, *, k_hops=K_HOPS, alpha=ALPHA,
                 steps=GRID_STEPS):
    """x: (B, N, F) batch of feature matrices on one shared graph (or (N, F))."""
    single = (x.ndim == 2)
    if single:
        x = x[None]
    b, n, f = x.shape
    hdim = w1.shape[1]
    c = w2.shape[1]

    # Pad the batch with zero graphs so each grid step is 128-lane aligned
    # (handles ragged batches instead of asserting divisibility).
    q = math.lcm(n, 128) // n               # graphs per 128 lanes
    gq = steps * q
    b_pad = ((b + gq - 1) // gq) * gq
    if b_pad != b:
        x = jnp.concatenate(
            [x, jnp.zeros((b_pad - b, n, f), x.dtype)], axis=0)
    graphs_per_step = b_pad // steps
    rows_per_step = graphs_per_step * n     # multiple of 128
    rows_pad = b_pad * n
    rows = b * n

    # Fold the K hops + alpha mix host-side, block-diagonalize per chunk, and
    # transpose for the feature-major kernel layout (yT = zT @ M^T).
    m = fold_propagation(p_dense, k_hops, alpha)
    m_chunk_t = jnp.kron(jnp.eye(graphs_per_step, dtype=m.dtype), m.T)

    # Transposed, lane-dense operands; MXU operands in bf16, the rest f32.
    xT = x.reshape(rows_pad, f).T.astype(jnp.bfloat16)        # (F, rows_pad)
    w1T = w1.T.astype(jnp.bfloat16)                           # (H, F)
    w2T = w2.T.astype(jnp.bfloat16)                           # (C, H)
    b1c = b1.reshape(hdim, 1).astype(jnp.float32)
    b2c = b2.reshape(c, 1).astype(jnp.float32)

    cost = pl.CostEstimate(
        flops=int(2 * (rows_pad * f * hdim + rows_pad * hdim * c
                       + rows_pad * rows_per_step * c)),
        transcendentals=int(rows_pad * (c + 1)),
        bytes_accessed=int(xT.size * 2 + w1T.size * 2 + w2T.size * 2
                           + (hdim + c) * 4 + m_chunk_t.size * 4
                           + rows_pad * c * 4))

    outT = pl.pallas_call(
        ssgc_kernel,
        out_shape=jax.ShapeDtypeStruct((c, rows_pad), jnp.float32),
        grid=(steps,),
        in_specs=[
            pl.BlockSpec((f, rows_per_step), lambda g: (0, g)),        # x chunk
            pl.BlockSpec((hdim, f), lambda g: (0, 0)),                 # W1^T (resident)
            pl.BlockSpec((hdim, 1), lambda g: (0, 0)),                 # b1   (resident)
            pl.BlockSpec((c, hdim), lambda g: (0, 0)),                 # W2^T (resident)
            pl.BlockSpec((c, 1), lambda g: (0, 0)),                    # b2   (resident)
            pl.BlockSpec((rows_per_step, rows_per_step), lambda g: (0, 0)),  # M^T (resident)
        ],
        out_specs=pl.BlockSpec((c, rows_per_step), lambda g: (0, g)),
        compiler_params=pltpu.CompilerParams(
            dimension_semantics=("parallel",)),                        # megacore if steps=2
        cost_estimate=cost,
    )(xT, w1T, b1c, w2T, b2c, m_chunk_t)

    out = outT[:, :rows].T.reshape(b, n, c)
    return out[0] if single else out


# --------------------------- JAX glue / preprocessing ------------------------
def build_normalized_adjacency(edge_index, num_nodes, dtype=jnp.float32):
    """Dense P = D^-1/2 (A + I) D^-1/2 exactly mirroring SSGCProp's norm.

    edge_index: (2, E) int32. Self loops are added; degree is computed over
    `row` (matching the reference, which uses degree(row)).
    P[col, row] += deg_inv_sqrt[row] * deg_inv_sqrt[col]  (aggregation at target).
    """
    self_loops = jnp.stack([jnp.arange(num_nodes, dtype=edge_index.dtype)] * 2)
    ei = jnp.concatenate([edge_index, self_loops], axis=1)
    row, col = ei[0], ei[1]
    deg = jnp.zeros((num_nodes,), dtype).at[row].add(1.0)
    deg_inv_sqrt = jnp.where(deg > 0, deg ** -0.5, 0.0)
    norm = deg_inv_sqrt[row] * deg_inv_sqrt[col]
    p = jnp.zeros((num_nodes, num_nodes), dtype).at[col, row].add(norm)
    return p


def init_params(key):
    """Deterministic torch.nn.Linear-style init (uniform(-1/sqrt(fan_in), ...))."""
    k1, k2, k3, k4 = jax.random.split(key, 4)
    bnd1 = 1.0 / (NUM_FEATURES ** 0.5)
    bnd2 = 1.0 / (HIDDEN ** 0.5)
    w1 = jax.random.uniform(k1, (NUM_FEATURES, HIDDEN), jnp.float32, -bnd1, bnd1)
    b1 = jax.random.uniform(k2, (1, HIDDEN), jnp.float32, -bnd1, bnd1)
    w2 = jax.random.uniform(k3, (HIDDEN, NUM_CLASSES), jnp.float32, -bnd2, bnd2)
    b2 = jax.random.uniform(k4, (1, NUM_CLASSES), jnp.float32, -bnd2, bnd2)
    return w1, b1, w2, b2


def ssgc_reference(x, w1, b1, w2, b2, p_dense, k_hops, alpha,
                   match_kernel_precision=False):
    """Pure-JAX mirror of SSGC_Net.forward (training=False), un-folded K-loop.

    With match_kernel_precision=True the operands are quantized to bf16 (and back
    to f32) exactly as the kernel does, so the comparison isolates kernel bugs
    from deliberate mixed-precision choices.
    """
    if match_kernel_precision:
        qz = lambda a: a.astype(jnp.bfloat16).astype(jnp.float32)
        x, w1, w2 = qz(x), qz(w1), qz(w2)
    h = jnp.maximum(jnp.dot(x, w1, precision=_HI) + b1, 0.0)
    if match_kernel_precision:
        h = h.astype(jnp.bfloat16).astype(jnp.float32)
    z = jnp.dot(h, w2, precision=_HI) + b2
    out = z
    for _ in range(k_hops):
        out = jnp.dot(p_dense, out, precision=_HI) + out
    y = alpha * z + (1.0 - alpha) * out / k_hops
    return jax.nn.log_softmax(y, axis=1)


if __name__ == "__main__":
    key = jax.random.PRNGKey(0)
    kx, kp = jax.random.split(key)

    # batch of node-feature matrices over one shared graph (transductive setup)
    x = jax.random.normal(kx, (BATCH, N_NODES, NUM_FEATURES), jnp.float32)

    # deterministic small graph: bidirectional ring over N_NODES nodes
    src = jnp.arange(N_NODES, dtype=jnp.int32)
    dst = (src + 1) % N_NODES
    edge_index = jnp.concatenate(
        [jnp.stack([src, dst]), jnp.stack([dst, src])], axis=1)   # (2, 2N)

    p_dense = build_normalized_adjacency(edge_index, N_NODES)
    w1, b1, w2, b2 = init_params(kp)

    out = ssgc_forward(x, w1, b1, w2, b2, p_dense)
    out = jax.block_until_ready(out)
    assert out.shape == (BATCH, N_NODES, NUM_CLASSES)

    # 1) rows of log_softmax must sum (in prob space) to 1
    row_sums = jnp.sum(jnp.exp(out), axis=-1)
    assert jnp.allclose(row_sums, 1.0, atol=1e-4)

    # 2) the host-side algebraic fold is exact (pure f32, no kernel involved)
    z_test = jax.random.normal(jax.random.PRNGKey(1),
                               (N_NODES, NUM_CLASSES), jnp.float32)
    unfolded = z_test
    for _ in range(K_HOPS):
        unfolded = jnp.dot(p_dense, unfolded, precision=_HI) + unfolded
    unfolded = ALPHA * z_test + (1.0 - ALPHA) * unfolded / K_HOPS
    folded = jnp.dot(fold_propagation(p_dense, K_HOPS, ALPHA), z_test,
                     precision=_HI)
    assert jnp.allclose(folded, unfolded, atol=1e-3, rtol=1e-4)

    # 3) kernel vs numerics-matched pure-JAX reference of the module forward
    #    (same bf16 quantization of x/W1/W2/h; remaining diff is only MXU pass /
    #    accumulation-order precision, well inside 2e-2).
    ref = jax.vmap(lambda xi: ssgc_reference(
        xi, w1, b1, w2, b2, p_dense, K_HOPS, ALPHA,
        match_kernel_precision=True))(x)
    max_diff = float(jnp.max(jnp.abs(out - ref)))
    assert jnp.allclose(out, ref, atol=2e-2, rtol=2e-2), (
        f"max abs diff vs reference: {max_diff}")

    # TODO(synk): F.dropout / dprate dropout are identity here (inference mode);
    # training-mode dropout would need pltpu.prng_* inside the kernel.
    print("KERNEL_OK")
</pallas_src>

<mosaic_0001>
module attributes {stable_mosaic.version = 11 : i64} {
  func.func @ssgc_kernel(%arg0: i32, %arg1: memref<16x256xbf16, #tpu.memory_space<vmem>>, %arg2: memref<32x16xbf16, #tpu.memory_space<vmem>>, %arg3: memref<32x1xf32, #tpu.memory_space<vmem>>, %arg4: memref<8x32xbf16, #tpu.memory_space<vmem>>, %arg5: memref<8x1xf32, #tpu.memory_space<vmem>>, %arg6: memref<256x256xf32, #tpu.memory_space<vmem>>, %arg7: memref<8x256xf32, #tpu.memory_space<vmem>>) attributes {dimension_semantics = [#tpu.dimension_semantics<parallel>], iteration_bounds = array<i64: 1>, scalar_prefetch = 0 : i64, scratch_operands = 0 : i64, tpu.core_type = #tpu.core_type<tc>, window_params = [{transform_indices = @transform_0, window_bounds = array<i64: 16, 256>}, {pipeline_mode = #tpu.pipeline_mode<synchronous>, transform_indices = @transform_1, window_bounds = array<i64: 32, 16>}, {pipeline_mode = #tpu.pipeline_mode<synchronous>, transform_indices = @transform_2, window_bounds = array<i64: 32, 1>}, {pipeline_mode = #tpu.pipeline_mode<synchronous>, transform_indices = @transform_3, window_bounds = array<i64: 8, 32>}, {pipeline_mode = #tpu.pipeline_mode<synchronous>, transform_indices = @transform_4, window_bounds = array<i64: 8, 1>}, {pipeline_mode = #tpu.pipeline_mode<synchronous>, transform_indices = @transform_5, window_bounds = array<i64: 256, 256>}, {transform_indices = @transform_6, window_bounds = array<i64: 8, 256>}]} {
    %c0 = arith.constant 0 : index
    %c0_0 = arith.constant 0 : index
    %0 = vector.load %arg2[%c0, %c0_0] : memref<32x16xbf16, #tpu.memory_space<vmem>>, vector<32x16xbf16>
    %c0_1 = arith.constant 0 : index
    %c0_2 = arith.constant 0 : index
    %1 = vector.load %arg1[%c0_1, %c0_2] : memref<16x256xbf16, #tpu.memory_space<vmem>>, vector<16x256xbf16>
    %cst = arith.constant dense<0.000000e+00> : vector<32x256xf32>
    %2 = tpu.matmul %0, %1, %cst {dimension_numbers = #tpu.dot_dimension_numbers<[1], [0], [0], [1], [0, 0, 1, 1], [], []>} : vector<32x16xbf16>, vector<16x256xbf16>, vector<32x256xf32> -> vector<32x256xf32>
    %c0_3 = arith.constant 0 : index
    %c0_4 = arith.constant 0 : index
    %3 = vector.load %arg3[%c0_3, %c0_4] : memref<32x1xf32, #tpu.memory_space<vmem>>, vector<32x1xf32>
    %4 = vector.broadcast %3 : vector<32x1xf32> to vector<32x256xf32>
    %5 = arith.addf %2, %4 : vector<32x256xf32>
    %cst_5 = arith.constant 0.000000e+00 : f32
    %6 = vector.broadcast %cst_5 : f32 to vector<32x256xf32>
    %7 = arith.maximumf %5, %6 : vector<32x256xf32>
    %c0_6 = arith.constant 0 : index
    %c0_7 = arith.constant 0 : index
    %8 = vector.load %arg4[%c0_6, %c0_7] : memref<8x32xbf16, #tpu.memory_space<vmem>>, vector<8x32xbf16>
    %9 = arith.truncf %7 : vector<32x256xf32> to vector<32x256xbf16>
    %cst_8 = arith.constant dense<0.000000e+00> : vector<8x256xf32>
    %10 = tpu.matmul %8, %9, %cst_8 {dimension_numbers = #tpu.dot_dimension_numbers<[1], [0], [0], [1], [0, 0, 1, 1], [], []>} : vector<8x32xbf16>, vector<32x256xbf16>, vector<8x256xf32> -> vector<8x256xf32>
    %c0_9 = arith.constant 0 : index
    %c0_10 = arith.constant 0 : index
    %11 = vector.load %arg5[%c0_9, %c0_10] : memref<8x1xf32, #tpu.memory_space<vmem>>, vector<8x1xf32>
    %12 = vector.broadcast %11 : vector<8x1xf32> to vector<8x256xf32>
    %13 = arith.addf %10, %12 : vector<8x256xf32>
    %c0_11 = arith.constant 0 : index
    %c0_12 = arith.constant 0 : index
    %14 = vector.load %arg6[%c0_11, %c0_12] : memref<256x256xf32, #tpu.memory_space<vmem>>, vector<256x256xf32>
    %cst_13 = arith.constant dense<0.000000e+00> : vector<8x256xf32>
    %15 = tpu.matmul %13, %14, %cst_13 {dimension_numbers = #tpu.dot_dimension_numbers<[1], [0], [0], [1], [0, 0, 1, 1], [], []>} : vector<8x256xf32>, vector<256x256xf32>, vector<8x256xf32> -> vector<8x256xf32>
    %cst_14 = arith.constant dense<0xFF800000> : vector<256xf32>
    %16 = vector.multi_reduction <maximumf>, %15, %cst_14 [0] : vector<8x256xf32> to vector<256xf32>
    %17 = vector.shape_cast %16 : vector<256xf32> to vector<1x256xf32>
    %18 = vector.broadcast %17 : vector<1x256xf32> to vector<8x256xf32>
    %19 = arith.subf %15, %18 : vector<8x256xf32>
    %20 = math.exp %19 : vector<8x256xf32>
    %cst_15 = arith.constant dense<0.000000e+00> : vector<256xf32>
    %21 = vector.multi_reduction <add>, %20, %cst_15 [0] : vector<8x256xf32> to vector<256xf32>
    %22 = vector.shape_cast %21 : vector<256xf32> to vector<1x256xf32>
    %23 = math.log %22 : vector<1x256xf32>
    %24 = vector.broadcast %23 : vector<1x256xf32> to vector<8x256xf32>
    %25 = arith.subf %19, %24 : vector<8x256xf32>
    %c0_16 = arith.constant 0 : index
    %c0_17 = arith.constant 0 : index
    %26 = vector.load %arg7[%c0_16, %c0_17] : memref<8x256xf32, #tpu.memory_space<vmem>>, vector<8x256xf32>
    tpu.vector_store %arg7[%c0_16, %c0_17], %25 {strides = array<i32>} : memref<8x256xf32, #tpu.memory_space<vmem>>, vector<8x256xf32>,
    return
  }
  func.func @transform_0(%arg0: i32) -> (i32, i32) {
    %c0_i32 = arith.constant 0 : i32
    %c0_i32_0 = arith.constant 0 : i32
    return %c0_i32, %arg0 : i32, i32
  }
  func.func @transform_1(%arg0: i32) -> (i32, i32) {
    %c0_i32 = arith.constant 0 : i32
    %c0_i32_0 = arith.constant 0 : i32
    %c0_i32_1 = arith.constant 0 : i32
    return %c0_i32, %c0_i32_0 : i32, i32
  }
  func.func @transform_2(%arg0: i32) -> (i32, i32) {
    %c0_i32 = arith.constant 0 : i32
    %c0_i32_0 = arith.constant 0 : i32
    %c0_i32_1 = arith.constant 0 : i32
    return %c0_i32, %c0_i32_0 : i32, i32
  }
  func.func @transform_3(%arg0: i32) -> (i32, i32) {
    %c0_i32 = arith.constant 0 : i32
    %c0_i32_0 = arith.constant 0 : i32
    %c0_i32_1 = arith.constant 0 : i32
    return %c0_i32, %c0_i32_0 : i32, i32
  }
  func.func @transform_4(%arg0: i32) -> (i32, i32) {
    %c0_i32 = arith.constant 0 : i32
    %c0_i32_0 = arith.constant 0 : i32
    %c0_i32_1 = arith.constant 0 : i32
    return %c0_i32, %c0_i32_0 : i32, i32
  }
  func.func @transform_5(%arg0: i32) -> (i32, i32) {
    %c0_i32 = arith.constant 0 : i32
    %c0_i32_0 = arith.constant 0 : i32
    %c0_i32_1 = arith.constant 0 : i32
    return %c0_i32, %c0_i32_0 : i32, i32
  }
  func.func @transform_6(%arg0: i32) -> (i32, i32) {
    %c0_i32 = arith.constant 0 : i32
    %c0_i32_0 = arith.constant 0 : i32
    return %c0_i32, %arg0 : i32, i32
  }
}

</mosaic_0001>

<llo_original>
// kernel: tpu_custom_call.1
$region0: #{tpu_custom_call.1}
  #allocation0 [shape = 'u32[]', space=smem, size = 0x4, offset = 0x4, fixed_abs, tag = 'smem constant byte address 0x4 - core index']
  #allocation1 [shape = 'u32[144,128]{1,0:T(1,128)}', space=vmem, size = 0x12000, scoped, tag = 'internal scratch']
  %s0 = inlined_call_operand.vmem [shape: bf16[16,256], index: 0, kind: input, shape index: {}]
  %s1 = inlined_call_operand.vmem [shape: bf16[32,16], index: 1, kind: input, shape index: {}]
  %s2 = inlined_call_operand.vmem [shape: f32[32,1], index: 2, kind: input, shape index: {}]
  %s3 = inlined_call_operand.vmem [shape: bf16[8,32], index: 3, kind: input, shape index: {}]
  %s4 = inlined_call_operand.vmem [shape: f32[8,1], index: 4, kind: input, shape index: {}]
  %s5 = inlined_call_operand.hbm [shape: f32[256,256], index: 5, kind: input, shape index: {}]
  %s6 = inlined_call_operand.hbm [shape: f32[8,256], index: 6, kind: output, shape index: {}]
  %s7 = sld [smem:[#allocation0]]
  $region38: #{tpu_custom_call.1} parent=0
    _
  %s9 = ssub.s32 1, %s7
  %s10 = scalar_select 0, %s9, %s7
  $region1: #{tpu_custom_call.1} parent=0
    #allocation2 [shape = 'u8[262144]{0}', space=vmem, size = 0x40000, scoped, tag = 'input window, operand 5, single buffered']
    #allocation3 [shape = 's32[1]{0}', space=sflag, size = 0x4, scoped, tag = 'scoped memory for tpu_custom_call.1']
    #allocation4 [shape = 's32[1]{0}', space=sflag, size = 0x4, scoped, tag = 'scoped memory for tpu_custom_call.1']
    #allocation5 [shape = 'u8[8192]{0}', space=vmem, size = 0x2000, scoped, tag = 'output window, operand 0, single buffered']
    %11 = vsyncpa [#allocation3], 0
    %12 = vsyncpa [#allocation4], 0
    // Predicated region
    $region2: #{tpu_custom_call.1} parent=1 // pred_check
      _
    $region3: #{tpu_custom_call.1} parent=1 // pred_check_branch
      %14 = sbr.rel (0) target = $region5
    $region4: #{tpu_custom_call.1} parent=1 // pred_region
      _
    $region5: #{tpu_custom_call.1} parent=1 // pred_fallthru
      _
    // Predicated region
    $region6: #{tpu_custom_call.1} parent=1 // pred_check
      _
    $region7: #{tpu_custom_call.1} parent=1 // pred_check_branch
      %16 = sbr.rel (0) target = $region9
    $region8: #{tpu_custom_call.1} parent=1 // pred_region
      _
    $region9: #{tpu_custom_call.1} parent=1 // pred_fallthru
      _
    // Predicated region
    $region10: #{tpu_custom_call.1} parent=1 // pred_check
      _
    $region11: #{tpu_custom_call.1} parent=1 // pred_check_branch
      %18 = sbr.rel (0) target = $region13
    $region12: #{tpu_custom_call.1} parent=1 // pred_region
      _
    $region13: #{tpu_custom_call.1} parent=1 // pred_fallthru
      _
    // Predicated region
    $region14: #{tpu_custom_call.1} parent=1 // pred_check
      _
    $region15: #{tpu_custom_call.1} parent=1 // pred_check_branch
      %20 = sbr.rel (0) target = $region17
    $region16: #{tpu_custom_call.1} parent=1 // pred_region
      _
    $region17: #{tpu_custom_call.1} parent=1 // pred_fallthru
      _
    // Predicated region
    $region18: #{tpu_custom_call.1} parent=1 // pred_check
      _
    $region19: #{tpu_custom_call.1} parent=1 // pred_check_branch
      %22 = sbr.rel (0) target = $region21
    $region20: #{tpu_custom_call.1} parent=1 // pred_region
      _
    $region21: #{tpu_custom_call.1} parent=1 // pred_fallthru
      _
    // Predicated region
    $region22: #{tpu_custom_call.1} parent=1 // pred_check
      _
    $region23: #{tpu_custom_call.1} parent=1 // pred_check_branch
      %24 = sbr.rel (0) target = $region25
    $region24: #{tpu_custom_call.1} parent=1 // pred_region
      %s26 = ssub.s32 8192, 8192
      %27 = vsyncadd [#allocation3], %s26
      %s28 = sshll.u32 [#allocation2], 4
      %s29 = int_to_ptr.vmem [resolvable:$true] %s28
      %34 = dma.hbm_to_vmem [thread:$0]  %s5, 8192, %s29, [#allocation3], 256, 256, 16
    $region25: #{tpu_custom_call.1} parent=1 // pred_fallthru
      _
    // Predicated region
    $region26: #{tpu_custom_call.1} parent=1 // pred_check
      _
    $region27: #{tpu_custom_call.1} parent=1 // pred_check_branch
      %36 = sbr.rel (0) target = $region29
    $region28: #{tpu_custom_call.1} parent=1 // pred_region
      %37 = dma.done [#allocation3], 8192
    $region29: #{tpu_custom_call.1} parent=1 // pred_fallthru
      _
    %v39 = vld [vmem:[%s1] sm:$0xf]
    %v40 = vld [vmem:[%s1 + $0x4] sm:$0xf]
    %v41 = vld [vmem:[%s1 + $0x8] sm:$0xf]
    %v42 = vld [vmem:[%s1 + $0xc] sm:$0xf]
    %v43 = vld [vmem:[%s0] sm:$0xff]
    %v44 = vld [vmem:[%s0 + $0x8] sm:$0xff]
    %v45 = vld [vmem:[%s2] sm:$0xff]
    %v46 = vld [vmem:[%s2 + $0x8] sm:$0xff]
    %v47 = vld [vmem:[%s2 + $0x10] sm:$0xff]
    %v48 = vld [vmem:[%s2 + $0x18] sm:$0xff]
    %50 = vset.pattern.permute.xlu0 0
    %51 = vperm.xlu0 %50, %v45
    %v52 = vpop.permute.xlu0 %51
    %55 = vset.pattern.permute.xlu0 0
    %56 = vperm.xlu0 %55, %v46
    %v57 = vpop.permute.xlu0 %56
    %60 = vset.pattern.permute.xlu0 0
    %61 = vperm.xlu0 %60, %v47
    %v62 = vpop.permute.xlu0 %61
    %65 = vset.pattern.permute.xlu0 0
    %66 = vperm.xlu0 %65, %v48
    %v67 = vpop.permute.xlu0 %66
    %v73 = vunpack.c.l.b16 %v39
    %v74 = vunpack.c.l.b16 %v40
    %v75 = vunpack.c.l.b16 %v41
    %v76 = vunpack.c.l.b16 %v42
    %v77 = vpack.c.b16 %v74, %v73
    %v78 = vpack.c.b16 %v76, %v75
    %v81 = vunpack.c.l.b16 %v43
    %v82 = vunpack.c.h.b16 %v43
    %v83 = vunpack.c.l.b16 %v44
    %v84 = vunpack.c.h.b16 %v44
    %v85 = vpack.c.b16 %v83, %v81
    %v86 = vpack.c.b16 %v84, %v82
    %vm89 = vcmask 130048
    %v91 = vsel %vm89, %v77, 0
    %v94 = vsel %vm89, %v78, 0
    %96 = vmatprep.subr.bf16.mxu0 %v86
    %97 = vmatpush1.bf16.msra.mxu0 %v85
    %98 = vmatprep.subr.bf16.mxu0 0
    %99 = vmatpush1.bf16.msra.mxu0 0
    %100 = vmatprep.subr.bf16.mxu0 0
    %101 = vmatpush1.bf16.msra.mxu0 0
    %102 = vmatprep.subr.bf16.mxu0 0
    %103 = vmatpush1.bf16.msra.mxu0 0
    %104 = vmatprep.subr.bf16.mxu0 0
    %105 = vmatpush1.bf16.msra.mxu0 0
    %106 = vmatprep.subr.bf16.mxu0 0
    %107 = vmatpush1.bf16.msra.mxu0 0
    %108 = vmatprep.subr.bf16.mxu0 0
    %109 = vmatpush1.bf16.msra.mxu0 0
    %110 = vmatprep.subr.bf16.mxu0 0
    %111 = vmatpush1.bf16.msra.mxu0 0
    %112 = vmatprep.subr.bf16.mxu0 0
    %113 = vmatpush1.bf16.msra.mxu0 0
    %114 = vmatprep.subr.bf16.mxu0 0
    %115 = vmatpush1.bf16.msra.mxu0 0
    %116 = vmatprep.subr.bf16.mxu0 0
    %117 = vmatpush1.bf16.msra.mxu0 0
    %118 = vmatprep.subr.bf16.mxu0 0
    %119 = vmatpush1.bf16.msra.mxu0 0
    %120 = vmatprep.subr.bf16.mxu0 0
    %121 = vmatpush1.bf16.msra.mxu0 0
    %122 = vmatprep.subr.bf16.mxu0 0
    %123 = vmatpush1.bf16.msra.mxu0 0
    %124 = vmatprep.subr.bf16.mxu0 0
    %125 = vmatpush1.bf16.msra.mxu0 0
    %126 = vmatprep.subr.bf16.mxu0 0
    %127 = vmatpush1.bf16.msra.mxu0 0
    %128 = vmatprep.mubr.bf16.mxu0 0
    %129 = vmatmul.mubr.bf16.gmra.mrb[0].mxu0 %v91
    %v130 = vpop.f32.mrb[0].mxu0
    %v131 = vadd.f32 %v52, %v130
    %v132 = vpop.f32.mrb[0].mxu0
    %v133 = vadd.f32 %v52, %v132
    %v134 = vpop.f32.mrb[0].mxu0
    %v135 = vadd.f32 %v57, %v134
    %v136 = vpop.f32.mrb[0].mxu0
    %v137 = vadd.f32 %v57, %v136
    %138 = vmatprep.mubr.bf16.mxu0 0
    %139 = vmatmul.mubr.bf16.gmra.mrb[0].mxu0 %v94
    %v140 = vpop.f32.mrb[0].mxu0
    %v141 = vadd.f32 %v62, %v140
    %v142 = vpop.f32.mrb[0].mxu0
    %v143 = vadd.f32 %v62, %v142
    %v144 = vpop.f32.mrb[0].mxu0
    %v145 = vadd.f32 %v67, %v144
    %v146 = vpop.f32.mrb[0].mxu0
    %v147 = vadd.f32 %v67, %v146
    %148 = vdwg.mxu0
    %v149 = vmax.f32 %v131, 0.0
    %v150 = vmax.f32 %v133, 0.0
    %v151 = vmax.f32 %v135, 0.0
    %v152 = vmax.f32 %v137, 0.0
    %v153 = vmax.f32 %v141, 0.0
    %v154 = vmax.f32 %v143, 0.0
    %v155 = vmax.f32 %v145, 0.0
    %v156 = vmax.f32 %v147, 0.0
    %v157 = vld [vmem:[%s3] sm:$0xf]
    %v158 = vpack.c.bf16 %v151, %v149
    %v159 = vpack.c.bf16 %v152, %v150
    %v160 = vpack.c.bf16 %v155, %v153
    %v161 = vpack.c.bf16 %v156, %v154
    %v162 = vld [vmem:[%s4] sm:$0xff]
    %164 = vset.pattern.permute.xlu0 0
    %165 = vperm.xlu0 %164, %v162
    %v166 = vpop.permute.xlu0 %165
    %vm168 = vcmask 261120
    %v170 = vsel %vm168, %v157, 0
    %172 = vmatprep.subr.bf16.mxu0 %v159
    %173 = vmatpush1.bf16.msra.mxu0 %v158
    %174 = vmatprep.subr.bf16.mxu0 %v161
    %175 = vmatpush1.bf16.msra.mxu0 %v160
    %176 = vmatprep.subr.bf16.mxu0 0
    %177 = vmatpush1.bf16.msra.mxu0 0
    %178 = vmatprep.subr.bf16.mxu0 0
    %179 = vmatpush1.bf16.msra.mxu0 0
    %180 = vmatprep.subr.bf16.mxu0 0
    %181 = vmatpush1.bf16.msra.mxu0 0
    %182 = vmatprep.subr.bf16.mxu0 0
    %183 = vmatpush1.bf16.msra.mxu0 0
    %184 = vmatprep.subr.bf16.mxu0 0
    %185 = vmatpush1.bf16.msra.mxu0 0
    %186 = vmatprep.subr.bf16.mxu0 0
    %187 = vmatpush1.bf16.msra.mxu0 0
    %188 = vmatprep.subr.bf16.mxu0 0
    %189 = vmatpush1.bf16.msra.mxu0 0
    %190 = vmatprep.subr.bf16.mxu0 0
    %191 = vmatpush1.bf16.msra.mxu0 0
    %192 = vmatprep.subr.bf16.mxu0 0
    %193 = vmatpush1.bf16.msra.mxu0 0
    %194 = vmatprep.subr.bf16.mxu0 0
    %195 = vmatpush1.bf16.msra.mxu0 0
    %196 = vmatprep.subr.bf16.mxu0 0
    %197 = vmatpush1.bf16.msra.mxu0 0
    %198 = vmatprep.subr.bf16.mxu0 0
    %199 = vmatpush1.bf16.msra.mxu0 0
    %200 = vmatprep.subr.bf16.mxu0 0
    %201 = vmatpush1.bf16.msra.mxu0 0
    %202 = vmatprep.subr.bf16.mxu0 0
    %203 = vmatpush1.bf16.msra.mxu0 0
    %204 = vmatprep.mubr.bf16.mxu0 0
    %205 = vmatmul.mubr.bf16.gmra.mrb[0].mxu0 %v170
    %v206 = vpop.f32.mrb[0].mxu0
    %v207 = vadd.f32 %v166, %v206
    %v208 = vpop.f32.mrb[0].mxu0
    %v209 = vadd.f32 %v166, %v208
    %v210 = vpop.f32.mrb[0].mxu0
    %v211 = vpop.f32.mrb[0].mxu0
    %212 = vdwg.mxu0
    %v213 = vld [vmem:[#allocation2] sm:$0xff]
    %v214 = vld [vmem:[#allocation2 + $0x8] sm:$0xff]
    %v215 = vld [vmem:[#allocation2 + $0x10] sm:$0xff]
    %v216 = vld [vmem:[#allocation2 + $0x18] sm:$0xff]
    %v217 = vld [vmem:[#allocation2 + $0x20] sm:$0xff]
    %v218 = vld [vmem:[#allocation2 + $0x28] sm:$0xff]
    %v219 = vld [vmem:[#allocation2 + $0x30] sm:$0xff]
    %v220 = vld [vmem:[#allocation2 + $0x38] sm:$0xff]
    %v221 = vld [vmem:[#allocation2 + $0x40] sm:$0xff]
    %v222 = vld [vmem:[#allocation2 + $0x48] sm:$0xff]
    %v223 = vld [vmem:[#allocation2 + $0x50] sm:$0xff]
    %v224 = vld [vmem:[#allocation2 + $0x58] sm:$0xff]
    %v225 = vld [vmem:[#allocation2 + $0x60] sm:$0xff]
    %v226 = vld [vmem:[#allocation2 + $0x68] sm:$0xff]
    %v227 = vld [vmem:[#allocation2 + $0x70] sm:$0xff]
    %v228 = vld [vmem:[#allocation2 + $0x78] sm:$0xff]
    %v229 = vld [vmem:[#allocation2 + $0x80] sm:$0xff]
    %v230 = vld [vmem:[#allocation2 + $0x88] sm:$0xff]
    %v231 = vld [vmem:[#allocation2 + $0x90] sm:$0xff]
    %v232 = vld [vmem:[#allocation2 + $0x98] sm:$0xff]
    %v233 = vld [vmem:[#allocation2 + $0xa0] sm:$0xff]
    %v234 = vld [vmem:[#allocation2 + $0xa8] sm:$0xff]
    %v235 = vld [vmem:[#allocation2 + $0xb0] sm:$0xff]
    %v236 = vld [vmem:[#allocation2 + $0xb8] sm:$0xff]
    %v237 = vld [vmem:[#allocation2 + $0xc0] sm:$0xff]
    %v238 = vld [vmem:[#allocation2 + $0xc8] sm:$0xff]
    %v239 = vld [vmem:[#allocation2 + $0xd0] sm:$0xff]
    %v240 = vld [vmem:[#allocation2 + $0xd8] sm:$0xff]
    %v241 = vld [vmem:[#allocation2 + $0xe0] sm:$0xff]
    %v242 = vld [vmem:[#allocation2 + $0xe8] sm:$0xff]
    %v243 = vld [vmem:[#allocation2 + $0xf0] sm:$0xff]
    %v244 = vld [vmem:[#allocation2 + $0xf8] sm:$0xff]
    %v245 = vld [vmem:[#allocation2 + $0x100] sm:$0xff]
    %v246 = vld [vmem:[#allocation2 + $0x108] sm:$0xff]
    %v247 = vld [vmem:[#allocation2 + $0x110] sm:$0xff]
    %v248 = vld [vmem:[#allocation2 + $0x118] sm:$0xff]
    %v249 = vld [vmem:[#allocation2 + $0x120] sm:$0xff]
    %v250 = vld [vmem:[#allocation2 + $0x128] sm:$0xff]
    %v251 = vld [vmem:[#allocation2 + $0x130] sm:$0xff]
    %v252 = vld [vmem:[#allocation2 + $0x138] sm:$0xff]
    %v253 = vld [vmem:[#allocation2 + $0x140] sm:$0xff]
    %v254 = vld [vmem:[#allocation2 + $0x148] sm:$0xff]
    %v255 = vld [vmem:[#allocation2 + $0x150] sm:$0xff]
    %v256 = vld [vmem:[#allocation2 + $0x158] sm:$0xff]
    %v257 = vld [vmem:[#allocation2 + $0x160] sm:$0xff]
    %v258 = vld [vmem:[#allocation2 + $0x168] sm:$0xff]
    %v259 = vld [vmem:[#allocation2 + $0x170] sm:$0xff]
    %v260 = vld [vmem:[#allocation2 + $0x178] sm:$0xff]
    %v261 = vld [vmem:[#allocation2 + $0x180] sm:$0xff]
    %v262 = vld [vmem:[#allocation2 + $0x188] sm:$0xff]
    %v263 = vld [vmem:[#allocation2 + $0x190] sm:$0xff]
    %v264 = vld [vmem:[#allocation2 + $0x198] sm:$0xff]
    %v265 = vld [vmem:[#allocation2 + $0x1a0] sm:$0xff]
    %v266 = vld [vmem:[#allocation2 + $0x1a8] sm:$0xff]
    %v267 = vld [vmem:[#allocation2 + $0x1b0] sm:$0xff]
    %v268 = vld [vmem:[#allocation2 + $0x1b8] sm:$0xff]
    %v269 = vld [vmem:[#allocation2 + $0x1c0] sm:$0xff]
    %v270 = vld [vmem:[#allocation2 + $0x1c8] sm:$0xff]
    %v271 = vld [vmem:[#allocation2 + $0x1d0] sm:$0xff]
    %v272 = vld [vmem:[#allocation2 + $0x1d8] sm:$0xff]
    %v273 = vld [vmem:[#allocation2 + $0x1e0] sm:$0xff]
    %v274 = vld [vmem:[#allocation2 + $0x1e8] sm:$0xff]
    %v275 = vld [vmem:[#allocation2 + $0x1f0] sm:$0xff]
    %v276 = vld [vmem:[#allocation2 + $0x1f8] sm:$0xff]
    %277 = vmatprep.subr.mxu0 %v214
    %278 = vmatpush1.msra.mxu0 %v213
    %279 = vmatprep.subr.mxu0 %v216
    %280 = vmatpush1.msra.mxu0 %v215
    %281 = vmatprep.subr.mxu0 %v218
    %282 = vmatpush1.msra.mxu0 %v217
    %283 = vmatprep.subr.mxu0 %v220
    %284 = vmatpush1.msra.mxu0 %v219
    %285 = vmatprep.subr.mxu0 %v222
    %286 = vmatpush1.msra.mxu0 %v221
    %287 = vmatprep.subr.mxu0 %v224
    %288 = vmatpush1.msra.mxu0 %v223
    %289 = vmatprep.subr.mxu0 %v226
    %290 = vmatpush1.msra.mxu0 %v225
    %291 = vmatprep.subr.mxu0 %v228
    %292 = vmatpush1.msra.mxu0 %v227
    %293 = vmatprep.subr.mxu0 %v230
    %294 = vmatpush1.msra.mxu0 %v229
    %295 = vmatprep.subr.mxu0 %v232
    %296 = vmatpush1.msra.mxu0 %v231
    %297 = vmatprep.subr.mxu0 %v234
    %298 = vmatpush1.msra.mxu0 %v233
    %299 = vmatprep.subr.mxu0 %v236
    %300 = vmatpush1.msra.mxu0 %v235
    %301 = vmatprep.subr.mxu0 %v238
    %302 = vmatpush1.msra.mxu0 %v237
    %303 = vmatprep.subr.mxu0 %v240
    %304 = vmatpush1.msra.mxu0 %v239
    %305 = vmatprep.subr.mxu0 %v242
    %306 = vmatpush1.msra.mxu0 %v241
    %307 = vmatprep.subr.mxu0 %v244
    %308 = vmatpush1.msra.mxu0 %v243
    %309 = vmatprep.subr.mxu0 %v246
    %310 = vmatpush1.msra.mxu0 %v245
    %311 = vmatprep.subr.mxu0 %v248
    %312 = vmatpush1.msra.mxu0 %v247
    %313 = vmatprep.subr.mxu0 %v250
    %314 = vmatpush1.msra.mxu0 %v249
    %315 = vmatprep.subr.mxu0 %v252
    %316 = vmatpush1.msra.mxu0 %v251
    %317 = vmatprep.subr.mxu0 %v254
    %318 = vmatpush1.msra.mxu0 %v253
    %319 = vmatprep.subr.mxu0 %v256
    %320 = vmatpush1.msra.mxu0 %v255
    %321 = vmatprep.subr.mxu0 %v258
    %322 = vmatpush1.msra.mxu0 %v257
    %323 = vmatprep.subr.mxu0 %v260
    %324 = vmatpush1.msra.mxu0 %v259
    %325 = vmatprep.subr.mxu0 %v262
    %326 = vmatpush1.msra.mxu0 %v261
    %327 = vmatprep.subr.mxu0 %v264
    %328 = vmatpush1.msra.mxu0 %v263
    %329 = vmatprep.subr.mxu0 %v266
    %330 = vmatpush1.msra.mxu0 %v265
    %331 = vmatprep.subr.mxu0 %v268
    %332 = vmatpush1.msra.mxu0 %v267
    %333 = vmatprep.subr.mxu0 %v270
    %334 = vmatpush1.msra.mxu0 %v269
    %335 = vmatprep.subr.mxu0 %v272
    %336 = vmatpush1.msra.mxu0 %v271
    %337 = vmatprep.subr.mxu0 %v274
    %338 = vmatpush1.msra.mxu0 %v273
    %339 = vmatprep.subr.mxu0 %v276
    %340 = vmatpush1.msra.mxu0 %v275
    %341 = vmatprep.mubr.f32.mxu0 %v209
    %342 = vmatmul.mubr.f32.gmra.mrb[0].mxu0 %v207
    %v343 = vpop.f32.mrb[0].mxu0
    %v344 = vadd.f32 0.0, %v343
    %v345 = vpop.f32.mrb[0].mxu0
    %v346 = vadd.f32 0.0, %v345
    %347 = vdwg.mxu0
    %v348 = vrot.slane %v344, 4
    %v349 = vmax.f32 %v344, %v348
    %v350 = vrot.slane %v349, 2
    %v351 = vmax.f32 %v349, %v350
    %v352 = vrot.slane %v351, 1
    %v353 = vmax.f32 %v351, %v352
    %v354 = vrot.slane %v346, 4
    %v355 = vmax.f32 %v346, %v354
    %v356 = vrot.slane %v355, 2
    %v357 = vmax.f32 %v355, %v356
    %v358 = vrot.slane %v357, 1
    %v359 = vmax.f32 %v357, %v358
    %v360 = vsub.f32 %v344, %v353
    %v361 = vsub.f32 %v346, %v359
    %v362 = vmul.f32 %v360, 1.442695
    %v363 = vpow.pop %v362
    %v364 = vmul.f32 %v361, 1.442695
    %v365 = vpow.pop %v364
    %v366 = vrot.slane %v363, 4
    %v367 = vadd.f32 %v363, %v366
    %v368 = vrot.slane %v367, 2
    %v369 = vadd.f32 %v367, %v368
    %v370 = vrot.slane %v369, 1
    %v371 = vadd.f32 %v369, %v370
    %v372 = vrot.slane %v365, 4
    %v373 = vadd.f32 %v365, %v372
    %v374 = vrot.slane %v373, 2
    %v375 = vadd.f32 %v373, %v374
    %v376 = vrot.slane %v375, 1
    %v377 = vadd.f32 %v375, %v376
    %v378 = vlog2.pop %v371
    %v379 = vmul.f32 %v378, 0.6931472
    %v380 = vlog2.pop %v377
    %v381 = vmul.f32 %v380, 0.6931472
    %v382 = vsub.f32 %v360, %v379
    %v383 = vsub.f32 %v361, %v381
    %384 = vst [vmem:[#allocation5] sm:$0xff] %v382
    %385 = vst [vmem:[#allocation5 + $0x8] sm:$0xff] %v383
    // Predicated region
    $region30: #{tpu_custom_call.1} parent=1 // pred_check
      _
    $region31: #{tpu_custom_call.1} parent=1 // pred_check_branch
      %387 = sbr.rel (0) target = $region33
    $region32: #{tpu_custom_call.1} parent=1 // pred_region
      %s389 = ssub.s32 256, 256
      %390 = vsyncadd [#allocation4], %s389
      %s392 = sshll.u32 [#allocation5], 4
      %s393 = int_to_ptr.vmem [resolvable:$true] %s392
      %395 = dma.vmem_to_hbm [thread:$0]  %s393, 256, %s6, [#allocation4]
    $region33: #{tpu_custom_call.1} parent=1 // pred_fallthru
      _
    // Predicated region
    $region34: #{tpu_custom_call.1} parent=1 // pred_check
      _
    $region35: #{tpu_custom_call.1} parent=1 // pred_check_branch
      %397 = sbr.rel (0) target = $region37
    $region36: #{tpu_custom_call.1} parent=1 // pred_region
      %398 = dma.done [#allocation4], 256
    $region37: #{tpu_custom_call.1} parent=1 // pred_fallthru
      _
    %399 = vsyncpa [#allocation3], 1
    %400 = vsyncpa [#allocation4], 1

</llo_original>
